<compile_context>
chip_gen: v5e
topology: v5e:2x2
jax: 0.10.0
libtpu: 0.0.40
codegen_flags: <defaults>
</compile_context>

<pallas_src>
import jax
import jax.numpy as jnp
from jax.experimental import pallas as pl
from jax.experimental.pallas import tpu as pltpu


def _autoencoder_kernel(x_ref, w1t_ref, b1_ref, w2t_ref, b2_ref, enc_ref, dec_ref):
    # x_ref: (tm, input_size) batch-major tile — PyTorch's native layout.
    xb = x_ref[...].astype(jnp.float32)

    # encoder(): fc1 + relu   ->  (tm, in) @ (in, hidden) = (tm, hidden)
    h1 = jnp.dot(xb, w1t_ref[...], preferred_element_type=jnp.float32)
    h1 = jnp.maximum(h1 + b1_ref[...], 0.0)
    enc_ref[...] = h1.astype(enc_ref.dtype)

    # decoder(): fc2          ->  (tm, hidden) @ (hidden, in) = (tm, in)
    h2 = jnp.dot(h1, w2t_ref[...], preferred_element_type=jnp.float32)
    dec_ref[...] = (h2 + b2_ref[...]).astype(dec_ref.dtype)


def autoencoder_forward(x, w1, b1, w2, b2, key=None, *, noise_level=0.01,
                        block_batch=8192):
    """PyTorch-layout forward.

    x : (B, input_size)            float32
    w1: (hidden_dim, input_size)   b1: (hidden_dim,)   (PyTorch nn.Linear layout)
    w2: (input_size, hidden_dim)   b2: (input_size,)
    key: optional jax PRNG key for the gaussian corruption (mask()).

    Returns (encode: (B, hidden_dim), decode: (B, input_size)).
    """
    B, input_size = x.shape
    hidden_dim = w1.shape[0]

    # mask(): additive gaussian corruption.  Done in the wrapper (fused elementwise
    # XLA op) so the kernel lowers on both compiled-TPU and interpret paths.
    if noise_level != 0.0 and key is not None:
        noise = jax.random.normal(key, x.shape, x.dtype)
        x = x + jnp.asarray(noise_level, x.dtype) * noise

    # --- batch tile selection -------------------------------------------------
    # Rows (second-to-last dim) must be a multiple of 8 (or the full dim).
    tm = min(int(block_batch), B)
    # Keep >= ~4 grid steps for large batches so both v7x TensorCores get work.
    tm = min(tm, max(128, -(-B // 4)))
    tm = max(8, ((tm + 7) // 8) * 8)
    grid = (pl.cdiv(B, tm),)          # ragged last block handled by Pallas

    # Double-buffered VMEM footprint (feature dims pad to 128 lanes in VMEM):
    #   2 buffers * (x + enc + dec tiles) ~= 2 * 3 * tm * 128 * 4 bytes.
    vmem_limit = int(min(48 * 1024 * 1024,
                         max(32 * 1024 * 1024, 4 * 3 * tm * 128 * 4)))

    # Weights pre-transposed once (tiny), biases as (1, N) rows for broadcasting.
    w1_t = w1.T.astype(jnp.float32)                    # (input_size, hidden_dim)
    w2_t = w2.T.astype(jnp.float32)                    # (hidden_dim, input_size)
    b1_r = b1.reshape(1, hidden_dim).astype(jnp.float32)
    b2_r = b2.reshape(1, input_size).astype(jnp.float32)

    encode, decode = pl.pallas_call(
        _autoencoder_kernel,
        out_shape=(
            jax.ShapeDtypeStruct((B, hidden_dim), x.dtype),
            jax.ShapeDtypeStruct((B, input_size), x.dtype),
        ),
        grid_spec=pltpu.PrefetchScalarGridSpec(
            num_scalar_prefetch=0,
            grid=grid,
            in_specs=[
                pl.BlockSpec((tm, input_size), lambda i: (i, 0)),            # x tile
                pl.BlockSpec((input_size, hidden_dim), lambda i: (0, 0)),    # w1.T
                pl.BlockSpec((1, hidden_dim), lambda i: (0, 0)),             # b1
                pl.BlockSpec((hidden_dim, input_size), lambda i: (0, 0)),    # w2.T
                pl.BlockSpec((1, input_size), lambda i: (0, 0)),             # b2
            ],
            out_specs=(
                pl.BlockSpec((tm, hidden_dim), lambda i: (i, 0)),
                pl.BlockSpec((tm, input_size), lambda i: (i, 0)),
            ),
        ),
        compiler_params=pltpu.CompilerParams(
            dimension_semantics=("parallel",),   # batch tiles split across TCs (v7x)
            vmem_limit_bytes=vmem_limit,
        ),
    )(x, w1_t, b1_r, w2_t, b2_r)

    return encode, decode


def init_params(key, input_size=16, hidden_dim=8):
    """PyTorch nn.Linear default init (uniform +/- 1/sqrt(fan_in)), PyTorch layout."""
    k1, k2, k3, k4 = jax.random.split(key, 4)
    bound1 = 1.0 / (input_size ** 0.5)
    bound2 = 1.0 / (hidden_dim ** 0.5)
    w1 = jax.random.uniform(k1, (hidden_dim, input_size), jnp.float32, -bound1, bound1)
    b1 = jax.random.uniform(k2, (hidden_dim,), jnp.float32, -bound1, bound1)
    w2 = jax.random.uniform(k3, (input_size, hidden_dim), jnp.float32, -bound2, bound2)
    b2 = jax.random.uniform(k4, (input_size,), jnp.float32, -bound2, bound2)
    return w1, b1, w2, b2


if __name__ == "__main__":
    input_size, hidden_dim, noise_level = 16, 8, 0.01
    batch = 200   # not a multiple of 128: exercises a 2-step grid + ragged last block

    key = jax.random.PRNGKey(0)
    kx, kparam, knoise = jax.random.split(key, 3)
    x = jax.random.normal(kx, (batch, input_size), jnp.float32)
    w1, b1, w2, b2 = init_params(kparam, input_size, hidden_dim)

    # --- exact correctness check vs plain-JAX reference with noise disabled ---
    enc0, dec0 = autoencoder_forward(x, w1, b1, w2, b2, key=None,
                                     noise_level=0.0, block_batch=128)
    jax.block_until_ready((enc0, dec0))
    enc_ref = jnp.maximum(x @ w1.T + b1, 0.0)
    dec_ref = enc_ref @ w2.T + b2
    assert enc0.shape == (batch, hidden_dim) and dec0.shape == (batch, input_size)
    assert jnp.allclose(enc0, enc_ref, atol=1e-5), "encode mismatch (noise off)"
    assert jnp.allclose(dec0, dec_ref, atol=1e-5), "decode mismatch (noise off)"

    # --- full forward with gaussian corruption (mask) ---
    encode, decode = autoencoder_forward(x, w1, b1, w2, b2, key=knoise,
                                         noise_level=noise_level, block_batch=128)
    jax.block_until_ready((encode, decode))
    assert encode.shape == (batch, hidden_dim)
    assert decode.shape == (batch, input_size)
    assert bool(jnp.all(jnp.isfinite(encode))) and bool(jnp.all(jnp.isfinite(decode)))
    assert bool(jnp.all(encode >= 0.0))                                 # ReLU
    # decoder is deterministic given encode: decode must equal encode @ w2.T + b2
    assert jnp.allclose(decode, encode @ w2.T + b2, atol=1e-4), "decoder mismatch"
    # corruption is tiny (noise_level=0.01): outputs stay near the clean reference
    assert float(jnp.max(jnp.abs(encode - enc_ref))) < 0.5

    print("KERNEL_OK")
</pallas_src>

<mosaic_0001>
module attributes {stable_mosaic.version = 11 : i64} {
  func.func @_autoencoder_kernel(%arg0: i32, %arg1: memref<128x16xf32, #tpu.memory_space<vmem>>, %arg2: memref<16x8xf32, #tpu.memory_space<vmem>>, %arg3: memref<1x8xf32, #tpu.memory_space<vmem>>, %arg4: memref<8x16xf32, #tpu.memory_space<vmem>>, %arg5: memref<1x16xf32, #tpu.memory_space<vmem>>, %arg6: memref<128x8xf32, #tpu.memory_space<vmem>>, %arg7: memref<128x16xf32, #tpu.memory_space<vmem>>) attributes {dimension_semantics = [#tpu.dimension_semantics<parallel>], iteration_bounds = array<i64: 2>, scalar_prefetch = 0 : i64, scratch_operands = 0 : i64, tpu.core_type = #tpu.core_type<tc>, window_params = [{transform_indices = @transform_0, window_bounds = array<i64: 128, 16>}, {pipeline_mode = #tpu.pipeline_mode<synchronous>, transform_indices = @transform_1, window_bounds = array<i64: 16, 8>}, {pipeline_mode = #tpu.pipeline_mode<synchronous>, transform_indices = @transform_2, window_bounds = array<i64: 1, 8>}, {pipeline_mode = #tpu.pipeline_mode<synchronous>, transform_indices = @transform_3, window_bounds = array<i64: 8, 16>}, {pipeline_mode = #tpu.pipeline_mode<synchronous>, transform_indices = @transform_4, window_bounds = array<i64: 1, 16>}, {transform_indices = @transform_5, window_bounds = array<i64: 128, 8>}, {transform_indices = @transform_6, window_bounds = array<i64: 128, 16>}]} {
    %c0 = arith.constant 0 : index
    %c0_0 = arith.constant 0 : index
    %0 = vector.load %arg1[%c0, %c0_0] : memref<128x16xf32, #tpu.memory_space<vmem>>, vector<128x16xf32>
    %c0_1 = arith.constant 0 : index
    %c0_2 = arith.constant 0 : index
    %1 = vector.load %arg2[%c0_1, %c0_2] : memref<16x8xf32, #tpu.memory_space<vmem>>, vector<16x8xf32>
    %cst = arith.constant dense<0.000000e+00> : vector<128x8xf32>
    %2 = tpu.matmul %0, %1, %cst {dimension_numbers = #tpu.dot_dimension_numbers<[1], [0], [0], [1], [0, 0, 1, 1], [], []>} : vector<128x16xf32>, vector<16x8xf32>, vector<128x8xf32> -> vector<128x8xf32>
    %c0_3 = arith.constant 0 : index
    %c0_4 = arith.constant 0 : index
    %3 = vector.load %arg3[%c0_3, %c0_4] : memref<1x8xf32, #tpu.memory_space<vmem>>, vector<1x8xf32>
    %4 = vector.broadcast %3 : vector<1x8xf32> to vector<128x8xf32>
    %5 = arith.addf %2, %4 : vector<128x8xf32>
    %cst_5 = arith.constant 0.000000e+00 : f32
    %6 = vector.broadcast %cst_5 : f32 to vector<128x8xf32>
    %7 = arith.maximumf %5, %6 : vector<128x8xf32>
    %c0_6 = arith.constant 0 : index
    %c0_7 = arith.constant 0 : index
    %8 = vector.load %arg6[%c0_6, %c0_7] : memref<128x8xf32, #tpu.memory_space<vmem>>, vector<128x8xf32>
    tpu.vector_store %arg6[%c0_6, %c0_7], %7 {strides = array<i32>} : memref<128x8xf32, #tpu.memory_space<vmem>>, vector<128x8xf32>,
    %c0_8 = arith.constant 0 : index
    %c0_9 = arith.constant 0 : index
    %9 = vector.load %arg4[%c0_8, %c0_9] : memref<8x16xf32, #tpu.memory_space<vmem>>, vector<8x16xf32>
    %cst_10 = arith.constant dense<0.000000e+00> : vector<128x16xf32>
    %10 = tpu.matmul %7, %9, %cst_10 {dimension_numbers = #tpu.dot_dimension_numbers<[1], [0], [0], [1], [0, 0, 1, 1], [], []>} : vector<128x8xf32>, vector<8x16xf32>, vector<128x16xf32> -> vector<128x16xf32>
    %c0_11 = arith.constant 0 : index
    %c0_12 = arith.constant 0 : index
    %11 = vector.load %arg5[%c0_11, %c0_12] : memref<1x16xf32, #tpu.memory_space<vmem>>, vector<1x16xf32>
    %12 = vector.broadcast %11 : vector<1x16xf32> to vector<128x16xf32>
    %13 = arith.addf %10, %12 : vector<128x16xf32>
    %c0_13 = arith.constant 0 : index
    %c0_14 = arith.constant 0 : index
    %14 = vector.load %arg7[%c0_13, %c0_14] : memref<128x16xf32, #tpu.memory_space<vmem>>, vector<128x16xf32>
    tpu.vector_store %arg7[%c0_13, %c0_14], %13 {strides = array<i32>} : memref<128x16xf32, #tpu.memory_space<vmem>>, vector<128x16xf32>,
    return
  }
  func.func @transform_0(%arg0: i32) -> (i32, i32) {
    %c0_i32 = arith.constant 0 : i32
    %c0_i32_0 = arith.constant 0 : i32
    return %arg0, %c0_i32 : i32, i32
  }
  func.func @transform_1(%arg0: i32) -> (i32, i32) {
    %c0_i32 = arith.constant 0 : i32
    %c0_i32_0 = arith.constant 0 : i32
    %c0_i32_1 = arith.constant 0 : i32
    return %c0_i32, %c0_i32_0 : i32, i32
  }
  func.func @transform_2(%arg0: i32) -> (i32, i32) {
    %c0_i32 = arith.constant 0 : i32
    %c0_i32_0 = arith.constant 0 : i32
    %c0_i32_1 = arith.constant 0 : i32
    return %c0_i32, %c0_i32_0 : i32, i32
  }
  func.func @transform_3(%arg0: i32) -> (i32, i32) {
    %c0_i32 = arith.constant 0 : i32
    %c0_i32_0 = arith.constant 0 : i32
    %c0_i32_1 = arith.constant 0 : i32
    return %c0_i32, %c0_i32_0 : i32, i32
  }
  func.func @transform_4(%arg0: i32) -> (i32, i32) {
    %c0_i32 = arith.constant 0 : i32
    %c0_i32_0 = arith.constant 0 : i32
    %c0_i32_1 = arith.constant 0 : i32
    return %c0_i32, %c0_i32_0 : i32, i32
  }
  func.func @transform_5(%arg0: i32) -> (i32, i32) {
    %c0_i32 = arith.constant 0 : i32
    %c0_i32_0 = arith.constant 0 : i32
    return %arg0, %c0_i32 : i32, i32
  }
  func.func @transform_6(%arg0: i32) -> (i32, i32) {
    %c0_i32 = arith.constant 0 : i32
    %c0_i32_0 = arith.constant 0 : i32
    return %arg0, %c0_i32 : i32, i32
  }
}

</mosaic_0001>

<llo_original>
// kernel: tpu_custom_call.1
$region0: #{tpu_custom_call.1}
  #allocation0 [shape = 'u32[]', space=smem, size = 0x4, offset = 0x4, fixed_abs, tag = 'smem constant byte address 0x4 - core index']
  #allocation1 [shape = 'u32[72,128]{1,0:T(1,128)}', space=vmem, size = 0x9000, scoped, tag = 'internal scratch']
  %s0 = inlined_call_operand.vmem [shape: f32[200,16], index: 0, kind: input, shape index: {}]
  %s1 = inlined_call_operand.vmem [shape: f32[16,8], index: 1, kind: input, shape index: {}]
  %s2 = inlined_call_operand.vmem [shape: f32[1,8], index: 2, kind: input, shape index: {}]
  %s3 = inlined_call_operand.vmem [shape: f32[8,16], index: 3, kind: input, shape index: {}]
  %s4 = inlined_call_operand.vmem [shape: f32[1,16], index: 4, kind: input, shape index: {}]
  %s5 = inlined_call_operand.vmem [shape: f32[200,8], index: 5, kind: output, shape index: {0}]
  %s6 = inlined_call_operand.vmem [shape: f32[200,16], index: 6, kind: output, shape index: {1}]
  %7 = xla_tuple %s5, %s6
  %s8 = sld [smem:[#allocation0]]
  $region157: #{tpu_custom_call.1} parent=0
    _
  %s10 = ssub.s32 1, %s8
  %s11 = scalar_select 0, %s10, %s8
  $region1: #{tpu_custom_call.1} parent=0
    #allocation2 [shape = 'u8[131072]{0}', space=vmem, size = 0x20000, scoped, tag = 'output window, operand 0']
    #allocation3 [shape = 'u8[131072]{0}', space=vmem, size = 0x20000, scoped, tag = 'output window, operand 1']
    loop: start=0, step=1, limit=4
    $region2: #{tpu_custom_call.1} parent=1 // loop_pre_header
      _
    $region3: #{tpu_custom_call.1} parent=1 // loop_header
      %s13 = sphi 0, %s17
      %p14 = scmp.ge.s32.totalorder %s13, 4
      %s23 = sphi 0, %s25
      %s26 = sphi 0, %s23
      %s27 = sphi 0, %s26
      %s43 = sphi 0, %s27
      %s47 = sphi 0, %s47
      %s49 = sphi 0, %s47
      %s50 = sphi 0, %s49
      %s64 = sphi 0, %s50
      %s68 = sphi 0, %s68
      %s70 = sphi 0, %s68
      %s71 = sphi 0, %s70
      %s85 = sphi 0, %s71
      %s89 = sphi 0, %s89
      %s91 = sphi 0, %s89
      %s92 = sphi 0, %s91
      %s106 = sphi 0, %s92
      %s110 = sphi 0, %s110
      %s112 = sphi 0, %s110
      %s113 = sphi 0, %s112
      %s127 = sphi 0, %s113
      %s133 = sphi 0, %s135
      %s136 = sphi 0, %s133
      %s137 = sphi 0, %s136
      %s153 = sphi 0, %s137
      %s159 = sphi 0, %s161
      %s162 = sphi 0, %s159
      %s163 = sphi 0, %s162
      %s179 = sphi 0, %s163
    $region4: #{tpu_custom_call.1} parent=1 // loop_header_branch
      %16 = sbr.rel (%p14) target = $region8
    $region5: #{tpu_custom_call.1} parent=1 // loop_body
      %s18 = ssub.s32 %s13, 1
      %s19 = ssub.s32 %s13, 2
      %s20 = sadd.s32 %s13, 1
      %s21 = ssub.s32 %s13, %s20
      %p22 = scmp.eq.s32.totalorder %s21, 0
      %s24 = sadd.s32 %s23, 1
      %s25 = scalar_select %p22, %s23, %s24
      %p28 = pneg %p22
      %p29 = scmp.eq.s32.totalorder %s13, 1
      %p30 = por %p28, %p29
      %p31 = scmp.ne.s32.totalorder %s23, %s26
      %p32 = scmp.eq.s32.totalorder %s13, 0
      %p33 = por %p31, %p32
      %p34 = scmp.ne.s32.totalorder %s23, %s26
      %p35 = scmp.eq.s32.totalorder %s18, 1
      %p36 = por %p34, %p35
      %p37 = scmp.ne.s32.totalorder %s26, %s27
      %p38 = scmp.eq.s32.totalorder %s18, 0
      %p39 = por %p37, %p38
      %p40 = scmp.ne.s32.totalorder %s26, %s27
      %p41 = scmp.eq.s32.totalorder %s19, 1
      %p42 = por %p40, %p41
      %p44 = scmp.ne.s32.totalorder %s27, %s43
      %p45 = scmp.eq.s32.totalorder %s19, 0
      %p46 = por %p44, %p45
      %s48 = sadd.s32 %s47, 1
      %p51 = scmp.eq.s32.totalorder %s13, 1
      %p52 = scmp.ne.s32.totalorder %s47, %s49
      %p53 = scmp.eq.s32.totalorder %s13, 0
      %p54 = por %p52, %p53
      %p55 = scmp.ne.s32.totalorder %s47, %s49
      %p56 = scmp.eq.s32.totalorder %s18, 1
      %p57 = por %p55, %p56
      %p58 = scmp.ne.s32.totalorder %s49, %s50
      %p59 = scmp.eq.s32.totalorder %s18, 0
      %p60 = por %p58, %p59
      %p61 = scmp.ne.s32.totalorder %s49, %s50
      %p62 = scmp.eq.s32.totalorder %s19, 1
      %p63 = por %p61, %p62
      %p65 = scmp.ne.s32.totalorder %s50, %s64
      %p66 = scmp.eq.s32.totalorder %s19, 0
      %p67 = por %p65, %p66
      %s69 = sadd.s32 %s68, 1
      %p72 = scmp.eq.s32.totalorder %s13, 1
      %p73 = scmp.ne.s32.totalorder %s68, %s70
      %p74 = scmp.eq.s32.totalorder %s13, 0
      %p75 = por %p73, %p74
      %p76 = scmp.ne.s32.totalorder %s68, %s70
      %p77 = scmp.eq.s32.totalorder %s18, 1
      %p78 = por %p76, %p77
      %p79 = scmp.ne.s32.totalorder %s70, %s71
      %p80 = scmp.eq.s32.totalorder %s18, 0
      %p81 = por %p79, %p80
      %p82 = scmp.ne.s32.totalorder %s70, %s71
      %p83 = scmp.eq.s32.totalorder %s19, 1
      %p84 = por %p82, %p83
      %p86 = scmp.ne.s32.totalorder %s71, %s85
      %p87 = scmp.eq.s32.totalorder %s19, 0
      %p88 = por %p86, %p87
      %s90 = sadd.s32 %s89, 1
      %p93 = scmp.eq.s32.totalorder %s13, 1
      %p94 = scmp.ne.s32.totalorder %s89, %s91
      %p95 = scmp.eq.s32.totalorder %s13, 0
      %p96 = por %p94, %p95
      %p97 = scmp.ne.s32.totalorder %s89, %s91
      %p98 = scmp.eq.s32.totalorder %s18, 1
      %p99 = por %p97, %p98
      %p100 = scmp.ne.s32.totalorder %s91, %s92
      %p101 = scmp.eq.s32.totalorder %s18, 0
      %p102 = por %p100, %p101
      %p103 = scmp.ne.s32.totalorder %s91, %s92
      %p104 = scmp.eq.s32.totalorder %s19, 1
      %p105 = por %p103, %p104
      %p107 = scmp.ne.s32.totalorder %s92, %s106
      %p108 = scmp.eq.s32.totalorder %s19, 0
      %p109 = por %p107, %p108
      %s111 = sadd.s32 %s110, 1
      %p114 = scmp.eq.s32.totalorder %s13, 1
      %p115 = scmp.ne.s32.totalorder %s110, %s112
      %p116 = scmp.eq.s32.totalorder %s13, 0
      %p117 = por %p115, %p116
      %p118 = scmp.ne.s32.totalorder %s110, %s112
      %p119 = scmp.eq.s32.totalorder %s18, 1
      %p120 = por %p118, %p119
      %p121 = scmp.ne.s32.totalorder %s112, %s113
      %p122 = scmp.eq.s32.totalorder %s18, 0
      %p123 = por %p121, %p122
      %p124 = scmp.ne.s32.totalorder %s112, %s113
      %p125 = scmp.eq.s32.totalorder %s19, 1
      %p126 = por %p124, %p125
      %p128 = scmp.ne.s32.totalorder %s113, %s127
      %p129 = scmp.eq.s32.totalorder %s19, 0
      %p130 = por %p128, %p129
      %s131 = ssub.s32 %s13, %s20
      %p132 = scmp.eq.s32.totalorder %s131, 0
      %s134 = sadd.s32 %s133, 1
      %s135 = scalar_select %p132, %s133, %s134
      %p138 = pneg %p132
      %p139 = scmp.eq.s32.totalorder %s13, 1
      %p140 = por %p138, %p139
      %p141 = scmp.ne.s32.totalorder %s133, %s136
      %p142 = scmp.eq.s32.totalorder %s13, 0
      %p143 = por %p141, %p142
      %p144 = scmp.ne.s32.totalorder %s133, %s136
      %p145 = scmp.eq.s32.totalorder %s18, 1
      %p146 = por %p144, %p145
      %p147 = scmp.ne.s32.totalorder %s136, %s137
      %p148 = scmp.eq.s32.totalorder %s18, 0
      %p149 = por %p147, %p148
      %p150 = scmp.ne.s32.totalorder %s136, %s137
      %p151 = scmp.eq.s32.totalorder %s19, 1
      %p152 = por %p150, %p151
      %p154 = scmp.ne.s32.totalorder %s137, %s153
      %p155 = scmp.eq.s32.totalorder %s19, 0
      %p156 = por %p154, %p155
      %s157 = ssub.s32 %s13, %s20
      %p158 = scmp.eq.s32.totalorder %s157, 0
      %s160 = sadd.s32 %s159, 1
      %s161 = scalar_select %p158, %s159, %s160
      %p164 = pneg %p158
      %p165 = scmp.eq.s32.totalorder %s13, 1
      %p166 = por %p164, %p165
      %p167 = scmp.ne.s32.totalorder %s159, %s162
      %p168 = scmp.eq.s32.totalorder %s13, 0
      %p169 = por %p167, %p168
      %p170 = scmp.ne.s32.totalorder %s159, %s162
      %p171 = scmp.eq.s32.totalorder %s18, 1
      %p172 = por %p170, %p171
      %p173 = scmp.ne.s32.totalorder %s162, %s163
      %p174 = scmp.eq.s32.totalorder %s18, 0
      %p175 = por %p173, %p174
      %p176 = scmp.ne.s32.totalorder %s162, %s163
      %p177 = scmp.eq.s32.totalorder %s19, 1
      %p178 = por %p176, %p177
      %p180 = scmp.ne.s32.totalorder %s163, %s179
      %p181 = scmp.eq.s32.totalorder %s19, 0
      %p182 = por %p180, %p181
      %p183 = scmp.le.s32.totalorder 1, %s13
      %p184 = scmp.lt.s32.totalorder %s13, 3
      %p185 = pnand %p183, %p184
      %p186 = pneg %p185
      // Predicated region
      $region9: #{tpu_custom_call.1} parent=5 // pred_check
        _
      $region10: #{tpu_custom_call.1} parent=5 // pred_check_branch
        %188 = sbr.rel (%p185) target = $region12
      $region11: #{tpu_custom_call.1} parent=5 // pred_region
        %s189 = ssub.s32 %s13, 1
        // Predicated region
        $region13: #{tpu_custom_call.1} parent=11 // pred_check
          %p190 = pneg %p60
        $region14: #{tpu_custom_call.1} parent=11 // pred_check_branch
          %192 = sbr.rel (%p190) target = $region16
        $region15: #{tpu_custom_call.1} parent=11 // pred_region
          _
        $region16: #{tpu_custom_call.1} parent=11 // pred_fallthru
          _
        // Predicated region
        $region17: #{tpu_custom_call.1} parent=11 // pred_check
          %p193 = pneg %p81
        $region18: #{tpu_custom_call.1} parent=11 // pred_check_branch
          %195 = sbr.rel (%p193) target = $region20
        $region19: #{tpu_custom_call.1} parent=11 // pred_region
          _
        $region20: #{tpu_custom_call.1} parent=11 // pred_fallthru
          _
        // Predicated region
        $region21: #{tpu_custom_call.1} parent=11 // pred_check
          %p196 = pneg %p102
        $region22: #{tpu_custom_call.1} parent=11 // pred_check_branch
          %198 = sbr.rel (%p196) target = $region24
        $region23: #{tpu_custom_call.1} parent=11 // pred_region
          _
        $region24: #{tpu_custom_call.1} parent=11 // pred_fallthru
          _
        // Predicated region
        $region25: #{tpu_custom_call.1} parent=11 // pred_check
          %p199 = pneg %p123
        $region26: #{tpu_custom_call.1} parent=11 // pred_check_branch
          %201 = sbr.rel (%p199) target = $region28
        $region27: #{tpu_custom_call.1} parent=11 // pred_region
          _
        $region28: #{tpu_custom_call.1} parent=11 // pred_fallthru
          _
      $region12: #{tpu_custom_call.1} parent=5 // pred_fallthru
        _
      %p202 = scmp.lt.s32.totalorder %s13, 2
      // Predicated region
      $region29: #{tpu_custom_call.1} parent=5 // pred_check
        %p203 = pneg %p202
      $region30: #{tpu_custom_call.1} parent=5 // pred_check_branch
        %205 = sbr.rel (%p203) target = $region32
      $region31: #{tpu_custom_call.1} parent=5 // pred_region
        // Predicated region
        $region33: #{tpu_custom_call.1} parent=31 // pred_check
          %p206 = pneg %p33
        $region34: #{tpu_custom_call.1} parent=31 // pred_check_branch
          %208 = sbr.rel (%p206) target = $region36
        $region35: #{tpu_custom_call.1} parent=31 // pred_region
          %s209 = smul.u32 16, %s13
          %s210 = ssub.s32 25, %s209
          %p211 = scmp.lt.s32.totalorder %s210, 16
          %s212 = scalar_select %p211, %s210, 16
          %s213 = smul.u32 8, %s212
          %p214 = scmp.lt.s32.totalorder %s209, 24
          %s215 = scalar_select %p214, %s209, 24
          %s216 = smul.addr %s215, 8
          %s217 = scalar_lea.vmem %s0, %s216
          %s218 = smul.u32 16, %s13
          %s219 = ssub.s32 25, %s218
          %p220 = scmp.lt.s32.totalorder %s219, 16
          %s221 = scalar_select %p220, %s219, 16
          %s222 = smul.u32 8, %s221
        $region36: #{tpu_custom_call.1} parent=31 // pred_fallthru
          _
      $region32: #{tpu_custom_call.1} parent=5 // pred_fallthru
        _
      %p223 = scmp.le.s32.totalorder 1, %s13
      %p224 = scmp.lt.s32.totalorder %s13, 3
      %p225 = pnand %p223, %p224
      %p226 = pneg %p225
      // Predicated region
      $region37: #{tpu_custom_call.1} parent=5 // pred_check
        _
      $region38: #{tpu_custom_call.1} parent=5 // pred_check_branch
        %228 = sbr.rel (%p225) target = $region40
      $region39: #{tpu_custom_call.1} parent=5 // pred_region
        %s229 = ssub.s32 %s13, 1
        %s230 = smul.u32 16, %s18
        %s231 = ssub.s32 25, %s230
        %p232 = scmp.lt.s32.totalorder %s231, 16
        %s233 = scalar_select %p232, %s231, 16
        %s234 = smul.u32 8, %s233
        %p235 = scmp.lt.s32.totalorder %s230, 24
        %s236 = scalar_select %p235, %s230, 24
        %s237 = smul.addr %s236, 8
        %s238 = scalar_lea.vmem %s0, %s237
        %p239 = pneg %p39
        %p240 = pneg %p36
        %p241 = pneg %p60
        %p242 = pneg %p57
        %p243 = pneg %p81
        %p244 = pneg %p78
        %p245 = pneg %p102
        %p246 = pneg %p99
        %p247 = pneg %p123
        %p248 = pneg %p120
        %p249 = pneg %p149
        %p250 = pneg %p146
        %s251 = sand.u32 %s136, 1
        %s252 = sand.u32 %s136, 1
        %s253 = smul.addr %s252, 128
        %s254 = scalar_lea.vmem [#allocation2], %s253
        %p255 = pneg %p175
        %p256 = pneg %p172
        %s257 = sand.u32 %s162, 1
        %s258 = sand.u32 %s162, 1
        %s259 = smul.addr %s258, 128
        %s260 = scalar_lea.vmem [#allocation3], %s259
        %s261 = smul.u32 16, %s18
        %s262 = ssub.s32 25, %s261
        %p263 = scmp.lt.s32.totalorder %s262, 16
        %s264 = scalar_select %p263, %s262, 16
        %s265 = smul.u32 8, %s264
        %p266 = scmp.lt.s32.totalorder %s261, 24
        %s267 = scalar_select %p266, %s261, 24
        %s268 = smul.addr %s267, 8
        %s269 = scalar_lea.vmem %s0, %s268
        %s270 = smul.u32 16, %s18
        %s271 = ssub.s32 25, %s270
        %p272 = scmp.lt.s32.totalorder %s271, 16
        %s273 = scalar_select %p272, %s271, 16
        %s274 = smul.u32 8, %s273
        %s275 = smul.u32 16, %s18
        %s276 = ssub.s32 25, %s275
        %p277 = scmp.lt.s32.totalorder %s276, 16
        %s278 = scalar_select %p277, %s276, 16
        %s279 = smul.u32 8, %s278
        %s280 = smul.u32 16, %s18
        %s281 = ssub.s32 25, %s280
        %p282 = scmp.lt.s32.totalorder %s281, 16
        %s283 = scalar_select %p282, %s281, 16
        %s284 = smul.u32 8, %s283
        %v285 = vld [vmem:[%s269] sm:$0xff]
        %v286 = vld [vmem:[%s269 + $0x8] sm:$0xff]
        %v287 = vld [vmem:[%s269 + $0x10] sm:$0xff]
        %v288 = vld [vmem:[%s269 + $0x18] sm:$0xff]
        %v289 = vld [vmem:[%s269 + $0x20] sm:$0xff]
        %v290 = vld [vmem:[%s269 + $0x28] sm:$0xff]
        %v291 = vld [vmem:[%s269 + $0x30] sm:$0xff]
        %v292 = vld [vmem:[%s269 + $0x38] sm:$0xff]
        %v293 = vld [vmem:[%s269 + $0x40] sm:$0xff]
        %v294 = vld [vmem:[%s269 + $0x48] sm:$0xff]
        %v295 = vld [vmem:[%s269 + $0x50] sm:$0xff]
        %v296 = vld [vmem:[%s269 + $0x58] sm:$0xff]
        %v297 = vld [vmem:[%s269 + $0x60] sm:$0xff]
        %v298 = vld [vmem:[%s269 + $0x68] sm:$0xff]
        %v299 = vld [vmem:[%s269 + $0x70] sm:$0xff]
        %v300 = vld [vmem:[%s269 + $0x78] sm:$0xff]
        %v301 = vld [vmem:[%s1] sm:$0xff]
        %v302 = vld [vmem:[%s1 + $0x8] sm:$0xff]
        %v303 = vld [vmem:[%s2] sm:$0x1]
        %v305 = vperm.slane %v303, 0
        %vm307 = vcmask 130048
        %v309 = vsel %vm307, %v285, 0
        %v312 = vsel %vm307, %v286, 0
        %v315 = vsel %vm307, %v287, 0
        %v318 = vsel %vm307, %v288, 0
        %v321 = vsel %vm307, %v289, 0
        %v324 = vsel %vm307, %v290, 0
        %v327 = vsel %vm307, %v291, 0
        %v330 = vsel %vm307, %v292, 0
        %v333 = vsel %vm307, %v293, 0
        %v336 = vsel %vm307, %v294, 0
        %v339 = vsel %vm307, %v295, 0
        %v342 = vsel %vm307, %v296, 0
        %v345 = vsel %vm307, %v297, 0
        %v348 = vsel %vm307, %v298, 0
        %v351 = vsel %vm307, %v299, 0
        %v354 = vsel %vm307, %v300, 0
        %356 = vmatpush.msra.mxu0 0.0
        %357 = vmatpush.msra.mxu0 0.0
        %358 = vmatpush.msra.mxu0 0.0
        %359 = vmatpush.msra.mxu0 0.0
        %360 = vmatpush.msra.mxu0 0.0
        %361 = vmatpush.msra.mxu0 0.0
        %362 = vmatpush.msra.mxu0 0.0
        %363 = vmatpush.msra.mxu0 0.0
        %364 = vmatpush.msra.mxu0 0.0
        %365 = vmatpush.msra.mxu0 0.0
        %366 = vmatpush.msra.mxu0 0.0
        %367 = vmatpush.msra.mxu0 0.0
        %368 = vmatpush.msra.mxu0 0.0
        %369 = vmatpush.msra.mxu0 0.0
        %370 = vmatpush.msra.mxu0 %v302
        %371 = vmatpush.msra.mxu0 %v301
        %372 = vmatmul.f32.gmra.mxu0 %v309
        %v373 = vpop.f32.mrf.mxu0
        %v374 = vadd.f32 %v305, %v373
        %375 = vmatmul.f32.gmra.mxu0 %v312
        %v376 = vpop.f32.mrf.mxu0
        %v377 = vadd.f32 %v305, %v376
        %378 = vmatmul.f32.gmra.mxu0 %v315
        %v379 = vpop.f32.mrf.mxu0
        %v380 = vadd.f32 %v305, %v379
        %381 = vmatmul.f32.gmra.mxu0 %v318
        %v382 = vpop.f32.mrf.mxu0
        %v383 = vadd.f32 %v305, %v382
        %384 = vmatmul.f32.gmra.mxu0 %v321
        %v385 = vpop.f32.mrf.mxu0
        %v386 = vadd.f32 %v305, %v385
        %387 = vmatmul.f32.gmra.mxu0 %v324
        %v388 = vpop.f32.mrf.mxu0
        %v389 = vadd.f32 %v305, %v388
        %390 = vmatmul.f32.gmra.mxu0 %v327
        %v391 = vpop.f32.mrf.mxu0
        %v392 = vadd.f32 %v305, %v391
        %393 = vmatmul.f32.gmra.mxu0 %v330
        %v394 = vpop.f32.mrf.mxu0
        %v395 = vadd.f32 %v305, %v394
        %396 = vmatmul.f32.gmra.mxu0 %v333
        %v397 = vpop.f32.mrf.mxu0
        %v398 = vadd.f32 %v305, %v397
        %399 = vmatmul.f32.gmra.mxu0 %v336
        %v400 = vpop.f32.mrf.mxu0
        %v401 = vadd.f32 %v305, %v400
        %402 = vmatmul.f32.gmra.mxu0 %v339
        %v403 = vpop.f32.mrf.mxu0
        %v404 = vadd.f32 %v305, %v403
        %405 = vmatmul.f32.gmra.mxu0 %v342
        %v406 = vpop.f32.mrf.mxu0
        %v407 = vadd.f32 %v305, %v406
        %408 = vmatmul.f32.gmra.mxu0 %v345
        %v409 = vpop.f32.mrf.mxu0
        %v410 = vadd.f32 %v305, %v409
        %411 = vmatmul.f32.gmra.mxu0 %v348
        %v412 = vpop.f32.mrf.mxu0
        %v413 = vadd.f32 %v305, %v412
        %414 = vmatmul.f32.gmra.mxu0 %v351
        %v415 = vpop.f32.mrf.mxu0
        %v416 = vadd.f32 %v305, %v415
        %417 = vmatmul.f32.gmra.mxu0 %v354
        %v418 = vpop.f32.mrf.mxu0
        %v419 = vadd.f32 %v305, %v418
        %420 = vdwg.mxu0
        %v421 = vmax.f32 %v374, 0.0
        %v422 = vmax.f32 %v377, 0.0
        %v423 = vmax.f32 %v380, 0.0
        %v424 = vmax.f32 %v383, 0.0
        %v425 = vmax.f32 %v386, 0.0
        %v426 = vmax.f32 %v389, 0.0
        %v427 = vmax.f32 %v392, 0.0
        %v428 = vmax.f32 %v395, 0.0
        %v429 = vmax.f32 %v398, 0.0
        %v430 = vmax.f32 %v401, 0.0
        %v431 = vmax.f32 %v404, 0.0
        %v432 = vmax.f32 %v407, 0.0
        %v433 = vmax.f32 %v410, 0.0
        %v434 = vmax.f32 %v413, 0.0
        %v435 = vmax.f32 %v416, 0.0
        %v436 = vmax.f32 %v419, 0.0
        %vm437 = vcmask 64512
        %438 = vst.msk [vmem:[%s254] sm:$0xff] %vm437, %v421
        %439 = vst.msk [vmem:[%s254 + $0x8] sm:$0xff] %vm437, %v422
        %440 = vst.msk [vmem:[%s254 + $0x10] sm:$0xff] %vm437, %v423
        %441 = vst.msk [vmem:[%s254 + $0x18] sm:$0xff] %vm437, %v424
        %442 = vst.msk [vmem:[%s254 + $0x20] sm:$0xff] %vm437, %v425
        %443 = vst.msk [vmem:[%s254 + $0x28] sm:$0xff] %vm437, %v426
        %444 = vst.msk [vmem:[%s254 + $0x30] sm:$0xff] %vm437, %v427
        %445 = vst.msk [vmem:[%s254 + $0x38] sm:$0xff] %vm437, %v428
        %446 = vst.msk [vmem:[%s254 + $0x40] sm:$0xff] %vm437, %v429
        %447 = vst.msk [vmem:[%s254 + $0x48] sm:$0xff] %vm437, %v430
        %448 = vst.msk [vmem:[%s254 + $0x50] sm:$0xff] %vm437, %v431
        %449 = vst.msk [vmem:[%s254 + $0x58] sm:$0xff] %vm437, %v432
        %450 = vst.msk [vmem:[%s254 + $0x60] sm:$0xff] %vm437, %v433
        %451 = vst.msk [vmem:[%s254 + $0x68] sm:$0xff] %vm437, %v434
        %452 = vst.msk [vmem:[%s254 + $0x70] sm:$0xff] %vm437, %v435
        %453 = vst.msk [vmem:[%s254 + $0x78] sm:$0xff] %vm437, %v436
        %v454 = vld [vmem:[%s3] sm:$0xff]
        %v455 = vld [vmem:[%s4] sm:$0x1]
        %v457 = vperm.slane %v455, 0
        %v460 = vsel %vm437, %v421, 0
        %v463 = vsel %vm437, %v422, 0
        %v466 = vsel %vm437, %v423, 0
        %v469 = vsel %vm437, %v424, 0
        %v472 = vsel %vm437, %v425, 0
        %v475 = vsel %vm437, %v426, 0
        %v478 = vsel %vm437, %v427, 0
        %v481 = vsel %vm437, %v428, 0
        %v484 = vsel %vm437, %v429, 0
        %v487 = vsel %vm437, %v430, 0
        %v490 = vsel %vm437, %v431, 0
        %v493 = vsel %vm437, %v432, 0
        %v496 = vsel %vm437, %v433, 0
        %v499 = vsel %vm437, %v434, 0
        %v502 = vsel %vm437, %v435, 0
        %v505 = vsel %vm437, %v436, 0
        %507 = vmatpush.msra.mxu0 0.0
        %508 = vmatpush.msra.mxu0 0.0
        %509 = vmatpush.msra.mxu0 0.0
        %510 = vmatpush.msra.mxu0 0.0
        %511 = vmatpush.msra.mxu0 0.0
        %512 = vmatpush.msra.mxu0 0.0
        %513 = vmatpush.msra.mxu0 0.0
        %514 = vmatpush.msra.mxu0 0.0
        %515 = vmatpush.msra.mxu0 0.0
        %516 = vmatpush.msra.mxu0 0.0
        %517 = vmatpush.msra.mxu0 0.0
        %518 = vmatpush.msra.mxu0 0.0
        %519 = vmatpush.msra.mxu0 0.0
        %520 = vmatpush.msra.mxu0 0.0
        %521 = vmatpush.msra.mxu0 0.0
        %522 = vmatpush.msra.mxu0 %v454
        %523 = vmatmul.f32.gmra.mxu0 %v460
        %v524 = vpop.f32.mrf.mxu0
        %v525 = vadd.f32 %v457, %v524
        %526 = vmatmul.f32.gmra.mxu0 %v463
        %v527 = vpop.f32.mrf.mxu0
        %v528 = vadd.f32 %v457, %v527
        %529 = vmatmul.f32.gmra.mxu0 %v466
        %v530 = vpop.f32.mrf.mxu0
        %v531 = vadd.f32 %v457, %v530
        %532 = vmatmul.f32.gmra.mxu0 %v469
        %v533 = vpop.f32.mrf.mxu0
        %v534 = vadd.f32 %v457, %v533
        %535 = vmatmul.f32.gmra.mxu0 %v472
        %v536 = vpop.f32.mrf.mxu0
        %v537 = vadd.f32 %v457, %v536
        %538 = vmatmul.f32.gmra.mxu0 %v475
        %v539 = vpop.f32.mrf.mxu0
        %v540 = vadd.f32 %v457, %v539
        %541 = vmatmul.f32.gmra.mxu0 %v478
        %v542 = vpop.f32.mrf.mxu0
        %v543 = vadd.f32 %v457, %v542
        %544 = vmatmul.f32.gmra.mxu0 %v481
        %v545 = vpop.f32.mrf.mxu0
        %v546 = vadd.f32 %v457, %v545
        %547 = vmatmul.f32.gmra.mxu0 %v484
        %v548 = vpop.f32.mrf.mxu0
        %v549 = vadd.f32 %v457, %v548
        %550 = vmatmul.f32.gmra.mxu0 %v487
        %v551 = vpop.f32.mrf.mxu0
        %v552 = vadd.f32 %v457, %v551
        %553 = vmatmul.f32.gmra.mxu0 %v490
        %v554 = vpop.f32.mrf.mxu0
        %v555 = vadd.f32 %v457, %v554
        %556 = vmatmul.f32.gmra.mxu0 %v493
        %v557 = vpop.f32.mrf.mxu0
        %v558 = vadd.f32 %v457, %v557
        %559 = vmatmul.f32.gmra.mxu0 %v496
        %v560 = vpop.f32.mrf.mxu0
        %v561 = vadd.f32 %v457, %v560
        %562 = vmatmul.f32.gmra.mxu0 %v499
        %v563 = vpop.f32.mrf.mxu0
        %v564 = vadd.f32 %v457, %v563
        %565 = vmatmul.f32.gmra.mxu0 %v502
        %v566 = vpop.f32.mrf.mxu0
        %v567 = vadd.f32 %v457, %v566
        %568 = vmatmul.f32.gmra.mxu0 %v505
        %v569 = vpop.f32.mrf.mxu0
        %v570 = vadd.f32 %v457, %v569
        %571 = vdwg.mxu0
        %572 = vst.msk [vmem:[%s260] sm:$0xff] %vm307, %v525
        %573 = vst.msk [vmem:[%s260 + $0x8] sm:$0xff] %vm307, %v528
        %574 = vst.msk [vmem:[%s260 + $0x10] sm:$0xff] %vm307, %v531
        %575 = vst.msk [vmem:[%s260 + $0x18] sm:$0xff] %vm307, %v534
        %576 = vst.msk [vmem:[%s260 + $0x20] sm:$0xff] %vm307, %v537
        %577 = vst.msk [vmem:[%s260 + $0x28] sm:$0xff] %vm307, %v540
        %578 = vst.msk [vmem:[%s260 + $0x30] sm:$0xff] %vm307, %v543
        %579 = vst.msk [vmem:[%s260 + $0x38] sm:$0xff] %vm307, %v546
        %580 = vst.msk [vmem:[%s260 + $0x40] sm:$0xff] %vm307, %v549
        %581 = vst.msk [vmem:[%s260 + $0x48] sm:$0xff] %vm307, %v552
        %582 = vst.msk [vmem:[%s260 + $0x50] sm:$0xff] %vm307, %v555
        %583 = vst.msk [vmem:[%s260 + $0x58] sm:$0xff] %vm307, %v558
        %584 = vst.msk [vmem:[%s260 + $0x60] sm:$0xff] %vm307, %v561
        %585 = vst.msk [vmem:[%s260 + $0x68] sm:$0xff] %vm307, %v564
        %586 = vst.msk [vmem:[%s260 + $0x70] sm:$0xff] %vm307, %v567
        %587 = vst.msk [vmem:[%s260 + $0x78] sm:$0xff] %vm307, %v570
        %s588 = sand.u32 %s136, 1
        %s589 = sand.u32 %s136, 1
        %s590 = smul.addr %s589, 128
        %s591 = scalar_lea.vmem [#allocation2], %s590
        %s592 = sand.u32 %s162, 1
        %s593 = sand.u32 %s162, 1
        %s594 = smul.addr %s593, 128
        %s595 = scalar_lea.vmem [#allocation3], %s594
        // Predicated region
        $region41: #{tpu_custom_call.1} parent=39 // pred_check
          %p596 = pneg %p146
        $region42: #{tpu_custom_call.1} parent=39 // pred_check_branch
          %598 = sbr.rel (%p596) target = $region44
        $region43: #{tpu_custom_call.1} parent=39 // pred_region
          %s599 = smul.u32 16, %s18
          %s600 = ssub.s32 25, %s599
          %p601 = scmp.lt.s32.totalorder %s600, 16
          %s602 = scalar_select %p601, %s600, 16
          %s603 = smul.u32 8, %s602
          %p604 = scmp.ne.s32.totalorder 0, %s603
          %s605 = smul.addr %s599, 8
          %s606 = scalar_lea.vmem %s5, %s605
          // Predicated region
          $region45: #{tpu_custom_call.1} parent=43 // pred_check
            %p607 = pneg %p604
          $region46: #{tpu_custom_call.1} parent=43 // pred_check_branch
            %609 = sbr.rel (%p607) target = $region48
          $region47: #{tpu_custom_call.1} parent=43 // pred_region
            // Predicated region
            $region49: #{tpu_custom_call.1} parent=47 // pred_check
              _
            $region50: #{tpu_custom_call.1} parent=47 // pred_check_branch
              %611 = sbr.rel (0) target = $region52
            $region51: #{tpu_custom_call.1} parent=47 // pred_region
              // Predicated region
              $region71: #{tpu_custom_call.1} parent=51 // pred_check
                _
              $region72: #{tpu_custom_call.1} parent=51 // pred_check_branch
                %691 = sbr.rel (0) target = $region74
              $region73: #{tpu_custom_call.1} parent=51 // pred_region
                %s692 = sshrl.u32 %s602, 4
                // While loop
                $region75: #{tpu_custom_call.1} parent=73 // loop_pre_header
                  _
                $region76: #{tpu_custom_call.1} parent=73 // loop_header
                  %s694 = sphi 0, %s696
                  %p695 = scmp.ge.s32.totalorder %s694, %s692
                  %s699 = sphi 0, %s736
                  %s700 = sphi %s591, %s739
                  %s701 = sphi %s606, %s740
                $region77: #{tpu_custom_call.1} parent=73 // loop_header_branch
                  %698 = sbr.rel (%p695) target = $region81
                $region78: #{tpu_custom_call.1} parent=73 // loop_body
                  %v702 = vld [vmem:[%s700] sm:$0xff]
                  %703 = vst [vmem:[%s701] sm:$0xff] %v702
                  %v704 = vld [vmem:[%s700 + $0x8] sm:$0xff]
                  %705 = vst [vmem:[%s701 + $0x8] sm:$0xff] %v704
                  %v706 = vld [vmem:[%s700 + $0x10] sm:$0xff]
                  %707 = vst [vmem:[%s701 + $0x10] sm:$0xff] %v706
                  %v708 = vld [vmem:[%s700 + $0x18] sm:$0xff]
                  %709 = vst [vmem:[%s701 + $0x18] sm:$0xff] %v708
                  %v710 = vld [vmem:[%s700 + $0x20] sm:$0xff]
                  %711 = vst [vmem:[%s701 + $0x20] sm:$0xff] %v710
                  %v712 = vld [vmem:[%s700 + $0x28] sm:$0xff]
                  %713 = vst [vmem:[%s701 + $0x28] sm:$0xff] %v712
                  %v714 = vld [vmem:[%s700 + $0x30] sm:$0xff]
                  %715 = vst [vmem:[%s701 + $0x30] sm:$0xff] %v714
                  %v716 = vld [vmem:[%s700 + $0x38] sm:$0xff]
                  %717 = vst [vmem:[%s701 + $0x38] sm:$0xff] %v716
                  %v718 = vld [vmem:[%s700 + $0x40] sm:$0xff]
                  %719 = vst [vmem:[%s701 + $0x40] sm:$0xff] %v718
                  %v720 = vld [vmem:[%s700 + $0x48] sm:$0xff]
                  %721 = vst [vmem:[%s701 + $0x48] sm:$0xff] %v720
                  %v722 = vld [vmem:[%s700 + $0x50] sm:$0xff]
                  %723 = vst [vmem:[%s701 + $0x50] sm:$0xff] %v722
                  %v724 = vld [vmem:[%s700 + $0x58] sm:$0xff]
                  %725 = vst [vmem:[%s701 + $0x58] sm:$0xff] %v724
                  %v726 = vld [vmem:[%s700 + $0x60] sm:$0xff]
                  %727 = vst [vmem:[%s701 + $0x60] sm:$0xff] %v726
                  %v728 = vld [vmem:[%s700 + $0x68] sm:$0xff]
                  %729 = vst [vmem:[%s701 + $0x68] sm:$0xff] %v728
                  %v730 = vld [vmem:[%s700 + $0x70] sm:$0xff]
                  %731 = vst [vmem:[%s701 + $0x70] sm:$0xff] %v730
                  %v732 = vld [vmem:[%s700 + $0x78] sm:$0xff]
                  %733 = vst [vmem:[%s701 + $0x78] sm:$0xff] %v732
                  %s734 = sadd.s32 1, %s699
                  %p735 = scmp.ge.s32.totalorder %s734, %s692
                  %s736 = scalar_select %p735, 0, %s734
                  %s737 = smul.u32 %s736, 128
                  %s738 = smul.u32 %s736, 128
                  %s739 = scalar_lea.vmem %s591, %s737 [#allocation2]
                  %s740 = scalar_lea.vmem %s606, %s738
                $region79: #{tpu_custom_call.1} parent=73 // loop_footer
                  %s696 = sadd.s32 %s694, 1
                $region80: #{tpu_custom_call.1} parent=73 // loop_footer_branch
                  %693 = sbr.rel target = $region76
                $region81: #{tpu_custom_call.1} parent=73 // loop_exit
                  _
                %s741 = sshrl.u32 %s602, 4
                %s742 = sand.u32 %s602, 15
                %s743 = smul.u32 %s741, 16
                %s744 = smul.u32 8, %s743
                %s745 = scalar_lea.vmem %s591, %s744 [#allocation2]
                %s746 = smul.u32 8, %s743
                %s747 = scalar_lea.vmem %s606, %s746
                // While loop
                $region82: #{tpu_custom_call.1} parent=73 // loop_pre_header
                  _
                $region83: #{tpu_custom_call.1} parent=73 // loop_header
                  %s749 = sphi 0, %s751
                  %p750 = scmp.ge.s32.totalorder %s749, %s742
                  %s754 = sphi 0, %s761
                  %s755 = sphi %s745, %s764
                  %s756 = sphi %s747, %s765
                $region84: #{tpu_custom_call.1} parent=73 // loop_header_branch
                  %753 = sbr.rel (%p750) target = $region88
                $region85: #{tpu_custom_call.1} parent=73 // loop_body
                  %v757 = vld [vmem:[%s755] sm:$0xff]
                  %758 = vst [vmem:[%s756] sm:$0xff] %v757
                  %s759 = sadd.s32 1, %s754
                  %p760 = scmp.ge.s32.totalorder %s759, %s742
                  %s761 = scalar_select %p760, 0, %s759
                  %s762 = smul.u32 %s761, 8
                  %s763 = smul.u32 %s761, 8
                  %s764 = scalar_lea.vmem %s745, %s762 [#allocation2]
                  %s765 = scalar_lea.vmem %s747, %s763
                $region86: #{tpu_custom_call.1} parent=73 // loop_footer
                  %s751 = sadd.s32 %s749, 1
                $region87: #{tpu_custom_call.1} parent=73 // loop_footer_branch
                  %748 = sbr.rel target = $region83
                $region88: #{tpu_custom_call.1} parent=73 // loop_exit
                  _
              $region74: #{tpu_custom_call.1} parent=51 // pred_fallthru
                _
              // Predicated region
              $region89: #{tpu_custom_call.1} parent=51 // pred_check
                _
              $region90: #{tpu_custom_call.1} parent=51 // pred_check_branch
                %767 = sbr.rel target = $region92
              $region91: #{tpu_custom_call.1} parent=51 // pred_region
                _
              $region92: #{tpu_custom_call.1} parent=51 // pred_fallthru
                _
            $region52: #{tpu_custom_call.1} parent=47 // pred_fallthru
              _
            // Predicated region
            $region53: #{tpu_custom_call.1} parent=47 // pred_check
              _
            $region54: #{tpu_custom_call.1} parent=47 // pred_check_branch
              %613 = sbr.rel target = $region56
            $region55: #{tpu_custom_call.1} parent=47 // pred_region
              %s615 = ssub.s32 256, 1
              %s616 = sshrl.u32 %s602, 4
              // While loop
              $region57: #{tpu_custom_call.1} parent=55 // loop_pre_header
                _
              $region58: #{tpu_custom_call.1} parent=55 // loop_header
                %s618 = sphi 0, %s620
                %p619 = scmp.ge.s32.totalorder %s618, %s616
                %s623 = sphi 0, %s660
                %s624 = sphi %s591, %s663
                %s625 = sphi %s606, %s664
              $region59: #{tpu_custom_call.1} parent=55 // loop_header_branch
                %622 = sbr.rel (%p619) target = $region63
              $region60: #{tpu_custom_call.1} parent=55 // loop_body
                %v626 = vld [vmem:[%s624] sm:%s615]
                %627 = vst [vmem:[%s625] sm:%s615] %v626
                %v628 = vld [vmem:[%s624 + $0x8] sm:%s615]
                %629 = vst [vmem:[%s625 + $0x8] sm:%s615] %v628
                %v630 = vld [vmem:[%s624 + $0x10] sm:%s615]
                %631 = vst [vmem:[%s625 + $0x10] sm:%s615] %v630
                %v632 = vld [vmem:[%s624 + $0x18] sm:%s615]
                %633 = vst [vmem:[%s625 + $0x18] sm:%s615] %v632
                %v634 = vld [vmem:[%s624 + $0x20] sm:%s615]
                %635 = vst [vmem:[%s625 + $0x20] sm:%s615] %v634
                %v636 = vld [vmem:[%s624 + $0x28] sm:%s615]
                %637 = vst [vmem:[%s625 + $0x28] sm:%s615] %v636
                %v638 = vld [vmem:[%s624 + $0x30] sm:%s615]
                %639 = vst [vmem:[%s625 + $0x30] sm:%s615] %v638
                %v640 = vld [vmem:[%s624 + $0x38] sm:%s615]
                %641 = vst [vmem:[%s625 + $0x38] sm:%s615] %v640
                %v642 = vld [vmem:[%s624 + $0x40] sm:%s615]
                %643 = vst [vmem:[%s625 + $0x40] sm:%s615] %v642
                %v644 = vld [vmem:[%s624 + $0x48] sm:%s615]
                %645 = vst [vmem:[%s625 + $0x48] sm:%s615] %v644
                %v646 = vld [vmem:[%s624 + $0x50] sm:%s615]
                %647 = vst [vmem:[%s625 + $0x50] sm:%s615] %v646
                %v648 = vld [vmem:[%s624 + $0x58] sm:%s615]
                %649 = vst [vmem:[%s625 + $0x58] sm:%s615] %v648
                %v650 = vld [vmem:[%s624 + $0x60] sm:%s615]
                %651 = vst [vmem:[%s625 + $0x60] sm:%s615] %v650
                %v652 = vld [vmem:[%s624 + $0x68] sm:%s615]
                %653 = vst [vmem:[%s625 + $0x68] sm:%s615] %v652
                %v654 = vld [vmem:[%s624 + $0x70] sm:%s615]
                %655 = vst [vmem:[%s625 + $0x70] sm:%s615] %v654
                %v656 = vld [vmem:[%s624 + $0x78] sm:%s615]
                %657 = vst [vmem:[%s625 + $0x78] sm:%s615] %v656
                %s658 = sadd.s32 1, %s623
                %p659 = scmp.ge.s32.totalorder %s658, %s616
                %s660 = scalar_select %p659, 0, %s658
                %s661 = smul.u32 %s660, 128
                %s662 = smul.u32 %s660, 128
                %s663 = scalar_lea.vmem %s591, %s661 [#allocation2]
                %s664 = scalar_lea.vmem %s606, %s662
              $region61: #{tpu_custom_call.1} parent=55 // loop_footer
                %s620 = sadd.s32 %s618, 1
              $region62: #{tpu_custom_call.1} parent=55 // loop_footer_branch
                %617 = sbr.rel target = $region58
              $region63: #{tpu_custom_call.1} parent=55 // loop_exit
                _
              %s665 = sshrl.u32 %s602, 4
              %s666 = sand.u32 %s602, 15
              %s667 = smul.u32 %s665, 16
              %s668 = smul.u32 8, %s667
              %s669 = scalar_lea.vmem %s591, %s668 [#allocation2]
              %s670 = smul.u32 8, %s667
              %s671 = scalar_lea.vmem %s606, %s670
              // While loop
              $region64: #{tpu_custom_call.1} parent=55 // loop_pre_header
                _
              $region65: #{tpu_custom_call.1} parent=55 // loop_header
                %s673 = sphi 0, %s675
                %p674 = scmp.ge.s32.totalorder %s673, %s666
                %s678 = sphi 0, %s685
                %s679 = sphi %s669, %s688
                %s680 = sphi %s671, %s689
              $region66: #{tpu_custom_call.1} parent=55 // loop_header_branch
                %677 = sbr.rel (%p674) target = $region70
              $region67: #{tpu_custom_call.1} parent=55 // loop_body
                %v681 = vld [vmem:[%s679] sm:%s615]
                %682 = vst [vmem:[%s680] sm:%s615] %v681
                %s683 = sadd.s32 1, %s678
                %p684 = scmp.ge.s32.totalorder %s683, %s666
                %s685 = scalar_select %p684, 0, %s683
                %s686 = smul.u32 %s685, 8
                %s687 = smul.u32 %s685, 8
                %s688 = scalar_lea.vmem %s669, %s686 [#allocation2]
                %s689 = scalar_lea.vmem %s671, %s687
              $region68: #{tpu_custom_call.1} parent=55 // loop_footer
                %s675 = sadd.s32 %s673, 1
              $region69: #{tpu_custom_call.1} parent=55 // loop_footer_branch
                %672 = sbr.rel target = $region65
              $region70: #{tpu_custom_call.1} parent=55 // loop_exit
                _
            $region56: #{tpu_custom_call.1} parent=47 // pred_fallthru
              _
          $region48: #{tpu_custom_call.1} parent=43 // pred_fallthru
            _
          %768 = vnop
        $region44: #{tpu_custom_call.1} parent=39 // pred_fallthru
          _
        // Predicated region
        $region93: #{tpu_custom_call.1} parent=39 // pred_check
          %p769 = pneg %p172
        $region94: #{tpu_custom_call.1} parent=39 // pred_check_branch
          %771 = sbr.rel (%p769) target = $region96
        $region95: #{tpu_custom_call.1} parent=39 // pred_region
          %s772 = smul.u32 16, %s18
          %s773 = ssub.s32 25, %s772
          %p774 = scmp.lt.s32.totalorder %s773, 16
          %s775 = scalar_select %p774, %s773, 16
          %s776 = smul.u32 8, %s775
          %p777 = scmp.ne.s32.totalorder 0, %s776
          %s778 = smul.addr %s772, 8
          %s779 = scalar_lea.vmem %s6, %s778
          // Predicated region
          $region97: #{tpu_custom_call.1} parent=95 // pred_check
            %p780 = pneg %p777
          $region98: #{tpu_custom_call.1} parent=95 // pred_check_branch
            %782 = sbr.rel (%p780) target = $region100
          $region99: #{tpu_custom_call.1} parent=95 // pred_region
            // Predicated region
            $region101: #{tpu_custom_call.1} parent=99 // pred_check
              _
            $region102: #{tpu_custom_call.1} parent=99 // pred_check_branch
              %784 = sbr.rel (0) target = $region104
            $region103: #{tpu_custom_call.1} parent=99 // pred_region
              // Predicated region
              $region123: #{tpu_custom_call.1} parent=103 // pred_check
                _
              $region124: #{tpu_custom_call.1} parent=103 // pred_check_branch
                %864 = sbr.rel (0) target = $region126
              $region125: #{tpu_custom_call.1} parent=103 // pred_region
                %s865 = sshrl.u32 %s775, 4
                // While loop
                $region127: #{tpu_custom_call.1} parent=125 // loop_pre_header
                  _
                $region128: #{tpu_custom_call.1} parent=125 // loop_header
                  %s867 = sphi 0, %s869
                  %p868 = scmp.ge.s32.totalorder %s867, %s865
                  %s872 = sphi 0, %s909
                  %s873 = sphi %s595, %s912
                  %s874 = sphi %s779, %s913
                $region129: #{tpu_custom_call.1} parent=125 // loop_header_branch
                  %871 = sbr.rel (%p868) target = $region133
                $region130: #{tpu_custom_call.1} parent=125 // loop_body
                  %v875 = vld [vmem:[%s873] sm:$0xff]
                  %876 = vst [vmem:[%s874] sm:$0xff] %v875
                  %v877 = vld [vmem:[%s873 + $0x8] sm:$0xff]
                  %878 = vst [vmem:[%s874 + $0x8] sm:$0xff] %v877
                  %v879 = vld [vmem:[%s873 + $0x10] sm:$0xff]
                  %880 = vst [vmem:[%s874 + $0x10] sm:$0xff] %v879
                  %v881 = vld [vmem:[%s873 + $0x18] sm:$0xff]
                  %882 = vst [vmem:[%s874 + $0x18] sm:$0xff] %v881
                  %v883 = vld [vmem:[%s873 + $0x20] sm:$0xff]
                  %884 = vst [vmem:[%s874 + $0x20] sm:$0xff] %v883
                  %v885 = vld [vmem:[%s873 + $0x28] sm:$0xff]
                  %886 = vst [vmem:[%s874 + $0x28] sm:$0xff] %v885
                  %v887 = vld [vmem:[%s873 + $0x30] sm:$0xff]
                  %888 = vst [vmem:[%s874 + $0x30] sm:$0xff] %v887
                  %v889 = vld [vmem:[%s873 + $0x38] sm:$0xff]
                  %890 = vst [vmem:[%s874 + $0x38] sm:$0xff] %v889
                  %v891 = vld [vmem:[%s873 + $0x40] sm:$0xff]
                  %892 = vst [vmem:[%s874 + $0x40] sm:$0xff] %v891
                  %v893 = vld [vmem:[%s873 + $0x48] sm:$0xff]
                  %894 = vst [vmem:[%s874 + $0x48] sm:$0xff] %v893
                  %v895 = vld [vmem:[%s873 + $0x50] sm:$0xff]
                  %896 = vst [vmem:[%s874 + $0x50] sm:$0xff] %v895
                  %v897 = vld [vmem:[%s873 + $0x58] sm:$0xff]
                  %898 = vst [vmem:[%s874 + $0x58] sm:$0xff] %v897
                  %v899 = vld [vmem:[%s873 + $0x60] sm:$0xff]
                  %900 = vst [vmem:[%s874 + $0x60] sm:$0xff] %v899
                  %v901 = vld [vmem:[%s873 + $0x68] sm:$0xff]
                  %902 = vst [vmem:[%s874 + $0x68] sm:$0xff] %v901
                  %v903 = vld [vmem:[%s873 + $0x70] sm:$0xff]
                  %904 = vst [vmem:[%s874 + $0x70] sm:$0xff] %v903
                  %v905 = vld [vmem:[%s873 + $0x78] sm:$0xff]
                  %906 = vst [vmem:[%s874 + $0x78] sm:$0xff] %v905
                  %s907 = sadd.s32 1, %s872
                  %p908 = scmp.ge.s32.totalorder %s907, %s865
                  %s909 = scalar_select %p908, 0, %s907
                  %s910 = smul.u32 %s909, 128
                  %s911 = smul.u32 %s909, 128
                  %s912 = scalar_lea.vmem %s595, %s910 [#allocation3]
                  %s913 = scalar_lea.vmem %s779, %s911
                $region131: #{tpu_custom_call.1} parent=125 // loop_footer
                  %s869 = sadd.s32 %s867, 1
                $region132: #{tpu_custom_call.1} parent=125 // loop_footer_branch
                  %866 = sbr.rel target = $region128
                $region133: #{tpu_custom_call.1} parent=125 // loop_exit
                  _
                %s914 = sshrl.u32 %s775, 4
                %s915 = sand.u32 %s775, 15
                %s916 = smul.u32 %s914, 16
                %s917 = smul.u32 8, %s916
                %s918 = scalar_lea.vmem %s595, %s917 [#allocation3]
                %s919 = smul.u32 8, %s916
                %s920 = scalar_lea.vmem %s779, %s919
                // While loop
                $region134: #{tpu_custom_call.1} parent=125 // loop_pre_header
                  _
                $region135: #{tpu_custom_call.1} parent=125 // loop_header
                  %s922 = sphi 0, %s924
                  %p923 = scmp.ge.s32.totalorder %s922, %s915
                  %s927 = sphi 0, %s934
                  %s928 = sphi %s918, %s937
                  %s929 = sphi %s920, %s938
                $region136: #{tpu_custom_call.1} parent=125 // loop_header_branch
                  %926 = sbr.rel (%p923) target = $region140
                $region137: #{tpu_custom_call.1} parent=125 // loop_body
                  %v930 = vld [vmem:[%s928] sm:$0xff]
                  %931 = vst [vmem:[%s929] sm:$0xff] %v930
                  %s932 = sadd.s32 1, %s927
                  %p933 = scmp.ge.s32.totalorder %s932, %s915
                  %s934 = scalar_select %p933, 0, %s932
                  %s935 = smul.u32 %s934, 8
                  %s936 = smul.u32 %s934, 8
                  %s937 = scalar_lea.vmem %s918, %s935 [#allocation3]
                  %s938 = scalar_lea.vmem %s920, %s936
                $region138: #{tpu_custom_call.1} parent=125 // loop_footer
                  %s924 = sadd.s32 %s922, 1
                $region139: #{tpu_custom_call.1} parent=125 // loop_footer_branch
                  %921 = sbr.rel target = $region135
                $region140: #{tpu_custom_call.1} parent=125 // loop_exit
                  _
              $region126: #{tpu_custom_call.1} parent=103 // pred_fallthru
                _
              // Predicated region
              $region141: #{tpu_custom_call.1} parent=103 // pred_check
                _
              $region142: #{tpu_custom_call.1} parent=103 // pred_check_branch
                %940 = sbr.rel target = $region144
              $region143: #{tpu_custom_call.1} parent=103 // pred_region
                _
              $region144: #{tpu_custom_call.1} parent=103 // pred_fallthru
                _
            $region104: #{tpu_custom_call.1} parent=99 // pred_fallthru
              _
            // Predicated region
            $region105: #{tpu_custom_call.1} parent=99 // pred_check
              _
            $region106: #{tpu_custom_call.1} parent=99 // pred_check_branch
              %786 = sbr.rel target = $region108
            $region107: #{tpu_custom_call.1} parent=99 // pred_region
              %s788 = ssub.s32 256, 1
              %s789 = sshrl.u32 %s775, 4
              // While loop
              $region109: #{tpu_custom_call.1} parent=107 // loop_pre_header
                _
              $region110: #{tpu_custom_call.1} parent=107 // loop_header
                %s791 = sphi 0, %s793
                %p792 = scmp.ge.s32.totalorder %s791, %s789
                %s796 = sphi 0, %s833
                %s797 = sphi %s595, %s836
                %s798 = sphi %s779, %s837
              $region111: #{tpu_custom_call.1} parent=107 // loop_header_branch
                %795 = sbr.rel (%p792) target = $region115
              $region112: #{tpu_custom_call.1} parent=107 // loop_body
                %v799 = vld [vmem:[%s797] sm:%s788]
                %800 = vst [vmem:[%s798] sm:%s788] %v799
                %v801 = vld [vmem:[%s797 + $0x8] sm:%s788]
                %802 = vst [vmem:[%s798 + $0x8] sm:%s788] %v801
                %v803 = vld [vmem:[%s797 + $0x10] sm:%s788]
                %804 = vst [vmem:[%s798 + $0x10] sm:%s788] %v803
                %v805 = vld [vmem:[%s797 + $0x18] sm:%s788]
                %806 = vst [vmem:[%s798 + $0x18] sm:%s788] %v805
                %v807 = vld [vmem:[%s797 + $0x20] sm:%s788]
                %808 = vst [vmem:[%s798 + $0x20] sm:%s788] %v807
                %v809 = vld [vmem:[%s797 + $0x28] sm:%s788]
                %810 = vst [vmem:[%s798 + $0x28] sm:%s788] %v809
                %v811 = vld [vmem:[%s797 + $0x30] sm:%s788]
                %812 = vst [vmem:[%s798 + $0x30] sm:%s788] %v811
                %v813 = vld [vmem:[%s797 + $0x38] sm:%s788]
                %814 = vst [vmem:[%s798 + $0x38] sm:%s788] %v813
                %v815 = vld [vmem:[%s797 + $0x40] sm:%s788]
                %816 = vst [vmem:[%s798 + $0x40] sm:%s788] %v815
                %v817 = vld [vmem:[%s797 + $0x48] sm:%s788]
                %818 = vst [vmem:[%s798 + $0x48] sm:%s788] %v817
                %v819 = vld [vmem:[%s797 + $0x50] sm:%s788]
                %820 = vst [vmem:[%s798 + $0x50] sm:%s788] %v819
                %v821 = vld [vmem:[%s797 + $0x58] sm:%s788]
                %822 = vst [vmem:[%s798 + $0x58] sm:%s788] %v821
                %v823 = vld [vmem:[%s797 + $0x60] sm:%s788]
                %824 = vst [vmem:[%s798 + $0x60] sm:%s788] %v823
                %v825 = vld [vmem:[%s797 + $0x68] sm:%s788]
                %826 = vst [vmem:[%s798 + $0x68] sm:%s788] %v825
                %v827 = vld [vmem:[%s797 + $0x70] sm:%s788]
                %828 = vst [vmem:[%s798 + $0x70] sm:%s788] %v827
                %v829 = vld [vmem:[%s797 + $0x78] sm:%s788]
                %830 = vst [vmem:[%s798 + $0x78] sm:%s788] %v829
                %s831 = sadd.s32 1, %s796
                %p832 = scmp.ge.s32.totalorder %s831, %s789
                %s833 = scalar_select %p832, 0, %s831
                %s834 = smul.u32 %s833, 128
                %s835 = smul.u32 %s833, 128
                %s836 = scalar_lea.vmem %s595, %s834 [#allocation3]
                %s837 = scalar_lea.vmem %s779, %s835
              $region113: #{tpu_custom_call.1} parent=107 // loop_footer
                %s793 = sadd.s32 %s791, 1
              $region114: #{tpu_custom_call.1} parent=107 // loop_footer_branch
                %790 = sbr.rel target = $region110
              $region115: #{tpu_custom_call.1} parent=107 // loop_exit
                _
              %s838 = sshrl.u32 %s775, 4
              %s839 = sand.u32 %s775, 15
              %s840 = smul.u32 %s838, 16
              %s841 = smul.u32 8, %s840
              %s842 = scalar_lea.vmem %s595, %s841 [#allocation3]
              %s843 = smul.u32 8, %s840
              %s844 = scalar_lea.vmem %s779, %s843
              // While loop
              $region116: #{tpu_custom_call.1} parent=107 // loop_pre_header
                _
              $region117: #{tpu_custom_call.1} parent=107 // loop_header
                %s846 = sphi 0, %s848
                %p847 = scmp.ge.s32.totalorder %s846, %s839
                %s851 = sphi 0, %s858
                %s852 = sphi %s842, %s861
                %s853 = sphi %s844, %s862
              $region118: #{tpu_custom_call.1} parent=107 // loop_header_branch
                %850 = sbr.rel (%p847) target = $region122
              $region119: #{tpu_custom_call.1} parent=107 // loop_body
                %v854 = vld [vmem:[%s852] sm:%s788]
                %855 = vst [vmem:[%s853] sm:%s788] %v854
                %s856 = sadd.s32 1, %s851
                %p857 = scmp.ge.s32.totalorder %s856, %s839
                %s858 = scalar_select %p857, 0, %s856
                %s859 = smul.u32 %s858, 8
                %s860 = smul.u32 %s858, 8
                %s861 = scalar_lea.vmem %s842, %s859 [#allocation3]
                %s862 = scalar_lea.vmem %s844, %s860
              $region120: #{tpu_custom_call.1} parent=107 // loop_footer
                %s848 = sadd.s32 %s846, 1
              $region121: #{tpu_custom_call.1} parent=107 // loop_footer_branch
                %845 = sbr.rel target = $region117
              $region122: #{tpu_custom_call.1} parent=107 // loop_exit
                _
            $region108: #{tpu_custom_call.1} parent=99 // pred_fallthru
              _
          $region100: #{tpu_custom_call.1} parent=95 // pred_fallthru
            _
          %941 = vnop
        $region96: #{tpu_custom_call.1} parent=39 // pred_fallthru
          _
      $region40: #{tpu_custom_call.1} parent=5 // pred_fallthru
        _
      %p942 = scmp.le.s32.totalorder 2, %s13
      // Predicated region
      $region145: #{tpu_custom_call.1} parent=5 // pred_check
        %p943 = pneg %p942
      $region146: #{tpu_custom_call.1} parent=5 // pred_check_branch
        %945 = sbr.rel (%p943) target = $region148
      $region147: #{tpu_custom_call.1} parent=5 // pred_region
        %s946 = ssub.s32 %s13, 2
        // Predicated region
        $region149: #{tpu_custom_call.1} parent=147 // pred_check
          %p947 = pneg %p152
        $region150: #{tpu_custom_call.1} parent=147 // pred_check_branch
          %949 = sbr.rel (%p947) target = $region152
        $region151: #{tpu_custom_call.1} parent=147 // pred_region
          %s950 = sand.u32 %s137, 1
          %s951 = sand.u32 %s137, 1
          %s952 = smul.addr %s951, 128
          %s953 = scalar_lea.vmem [#allocation2], %s952
        $region152: #{tpu_custom_call.1} parent=147 // pred_fallthru
          _
        // Predicated region
        $region153: #{tpu_custom_call.1} parent=147 // pred_check
          %p954 = pneg %p178
        $region154: #{tpu_custom_call.1} parent=147 // pred_check_branch
          %956 = sbr.rel (%p954) target = $region156
        $region155: #{tpu_custom_call.1} parent=147 // pred_region
          %s957 = sand.u32 %s163, 1
          %s958 = sand.u32 %s163, 1
          %s959 = smul.addr %s958, 128
          %s960 = scalar_lea.vmem [#allocation3], %s959
        $region156: #{tpu_custom_call.1} parent=147 // pred_fallthru
          _
      $region148: #{tpu_custom_call.1} parent=5 // pred_fallthru
        _
    $region6: #{tpu_custom_call.1} parent=1 // loop_footer
      %s17 = sadd.s32 1, %s13
    $region7: #{tpu_custom_call.1} parent=1 // loop_footer_branch
      %12 = sbr.rel target = $region3
    $region8: #{tpu_custom_call.1} parent=1 // loop_exit
      _

</llo_original>
